<compile_context>
chip_gen: v6e
topology: v6e:2x2x1
jax: 0.10.0
libtpu: 0.0.40
codegen_flags: <defaults>
</compile_context>

<pallas_src>
import functools

import jax
import jax.numpy as jnp
from jax.experimental import pallas as pl
from jax.experimental.pallas import tpu as pltpu


def _round_up(x, m):
    return ((x + m - 1) // m) * m


def _sublane_granule(itemsize):
    # Sublane packing granule for the second-minor block dim.
    return {4: 8, 2: 16, 1: 32}.get(itemsize, 8)


def _vmem_limit_bytes():
    """Scoped-VMEM budget to request: ~3/4 of physical, capped at 96 MiB."""
    try:
        cap = pltpu.get_tpu_info().vmem_capacity_bytes
    except Exception:  # conservative (v7x-sized) default if the query fails
        cap = 64 * 1024 * 1024
    return int(min(cap * 3 // 4, 96 * 1024 * 1024))


def _choose_block_rows(n, c, x_itemsize, vmem_limit):
    """Largest row tile whose double-buffered copies fit the VMEM budget."""
    sub = _sublane_granule(x_itemsize)
    # Per-row VMEM footprint: double-buffered x tile + tiny target/output bufs.
    bytes_per_row = 2 * c * x_itemsize + 2 * 4 + 2 * 4
    rows = max(sub, (vmem_limit * 3 // 4) // bytes_per_row)
    # Keep >= ~8 grid steps so the 'parallel' axis can feed both TensorCores
    # on multi-core parts (v7x) -- but never shrink below 512 rows for that.
    rows = min(rows, max(512, -(-n // 8)))
    # Multiples of 128 keep the lane-dense output stores unmasked; below 128
    # fall back to the sublane granule.
    if rows >= 128:
        rows = (rows // 128) * 128
    else:
        rows = max(sub, (rows // sub) * sub)
    return int(min(rows, _round_up(n, sub)))


def _ls_ce_kernel(x_ref, tgt_ref, out_ref, *, confidence, smoothing, n_rows,
                  block_rows, lane_dense):
    # x_ref: (TB, C) logits, tgt_ref: (TB, 1) int32,
    # out_ref: (1, TB) f32 (lane-dense) or (TB, 1) f32 (fallback).
    x = x_ref[...].astype(jnp.float32)                        # (TB, C)
    tgt = tgt_ref[...]                                        # (TB, 1)
    c = x.shape[-1]

    # Stable log-softmax pieces, never materializing logprobs = z - lse:
    #   nll    = lse - z[target]
    #   smooth = lse - sum(z)/C
    #   loss   = confidence*nll + smoothing*smooth
    #          = lse - confidence*z_t - (smoothing/C)*sum_z
    m = jnp.max(x, axis=-1, keepdims=True)                    # (TB, 1)
    z = x - m                                                 # (TB, C)
    lse = jnp.log(jnp.sum(jnp.exp(z), axis=-1, keepdims=True))

    col = jax.lax.broadcasted_iota(jnp.int32, z.shape, 1)     # class ids
    z_t = jnp.sum(jnp.where(col == tgt, z, 0.0), axis=-1, keepdims=True)
    sum_z = jnp.sum(z, axis=-1, keepdims=True)

    loss = lse - confidence * z_t - (smoothing / c) * sum_z   # (TB, 1)

    # Zero rows of the (possibly partial) last tile that lie beyond N so
    # garbage reads never reach HBM.
    row = (pl.program_id(0) * block_rows
           + jax.lax.broadcasted_iota(jnp.int32, loss.shape, 0))
    loss = jnp.where(row < n_rows, loss, 0.0)

    if lane_dense:
        # Sublane column -> lane-dense row so the store is wide and unmasked.
        out_ref[...] = loss.reshape(1, block_rows).astype(out_ref.dtype)
    else:
        out_ref[...] = loss.astype(out_ref.dtype)


def _build_call(n, c, block_rows, num_blocks, vmem_limit, confidence,
                smoothing, lane_dense):
    kernel = functools.partial(
        _ls_ce_kernel, confidence=confidence, smoothing=smoothing,
        n_rows=n, block_rows=block_rows, lane_dense=lane_dense)
    if lane_dense:
        out_shape = jax.ShapeDtypeStruct((num_blocks, block_rows), jnp.float32)
        out_spec = pl.BlockSpec((1, block_rows), lambda i: (i, 0))
    else:
        out_shape = jax.ShapeDtypeStruct((num_blocks * block_rows, 1),
                                         jnp.float32)
        out_spec = pl.BlockSpec((block_rows, 1), lambda i: (i, 0))
    return pl.pallas_call(
        kernel,
        out_shape=out_shape,
        grid_spec=pltpu.PrefetchScalarGridSpec(
            num_scalar_prefetch=0,
            grid=(num_blocks,),
            in_specs=[
                pl.BlockSpec((block_rows, c), lambda i: (i, 0)),
                pl.BlockSpec((block_rows, 1), lambda i: (i, 0)),
            ],
            out_specs=out_spec,
        ),
        compiler_params=pltpu.CompilerParams(
            dimension_semantics=("parallel",),
            vmem_limit_bytes=int(vmem_limit),
        ),
    )


# Flipped to False (once) if this Mosaic build rejects the lane-dense store's
# sublane->lane relayout; the narrow-output fallback is numerically identical.
_LANE_DENSE_OK = [True]


def label_smoothing_cross_entropy(x, target, *, reduction="mean",
                                  smoothing=0.1, block_rows=None):
    """Matches LabelSmoothingCrossEntropy.forward.

    x: (N, C) logits (f32 or bf16); target: (N,) integer class indices.
    """
    assert smoothing < 1.0
    assert x.ndim == 2, "expected (N, C) logits"
    confidence = 1.0 - smoothing
    n, c = x.shape
    x_itemsize = jnp.dtype(x.dtype).itemsize
    sub = _sublane_granule(x_itemsize)

    vmem_limit = _vmem_limit_bytes()
    if block_rows is None:
        block_rows = _choose_block_rows(n, c, x_itemsize, vmem_limit)
    else:
        block_rows = max(sub, _round_up(int(block_rows), sub))
    num_blocks = -(-n // block_rows)

    tgt2d = target.astype(jnp.int32).reshape(n, 1)

    def run(lane_dense):
        call = _build_call(n, c, block_rows, num_blocks, vmem_limit,
                           confidence, smoothing, lane_dense)
        out = call(x, tgt2d)
        return out.reshape(num_blocks * block_rows)[:n]

    if _LANE_DENSE_OK[0]:
        try:
            loss = run(lane_dense=True)
        except Exception:
            _LANE_DENSE_OK[0] = False
            loss = run(lane_dense=False)
    else:
        loss = run(lane_dense=False)

    if reduction == "mean":
        return jnp.mean(loss)
    elif reduction == "none":
        return loss
    else:
        raise NotImplementedError(reduction)


def _reference(x, target, reduction, smoothing=0.1):
    # Pure-JAX reference mirroring the PyTorch module.
    confidence = 1.0 - smoothing
    logprobs = jax.nn.log_softmax(x.astype(jnp.float32), axis=-1)
    nll = -jnp.take_along_axis(
        logprobs, target[:, None].astype(jnp.int32), axis=-1)[:, 0]
    smooth = -jnp.mean(logprobs, axis=-1)
    loss = confidence * nll + smoothing * smooth
    return jnp.mean(loss) if reduction == "mean" else loss


if __name__ == "__main__":
    key = jax.random.PRNGKey(0)
    k1, k2 = jax.random.split(key)

    # Small demo: batch 18 (deliberately not a multiple of 8, to exercise the
    # masked partial tile), 32 classes.
    N, C = 18, 32
    x = jax.random.normal(k1, (N, C), dtype=jnp.float32)
    target = jax.random.randint(k2, (N,), 0, C, dtype=jnp.int32)

    out_mean = label_smoothing_cross_entropy(x, target, reduction="mean")
    out_none = label_smoothing_cross_entropy(x, target, reduction="none")
    jax.block_until_ready((out_mean, out_none))

    assert jnp.allclose(out_mean, _reference(x, target, "mean"),
                        atol=1e-5, rtol=1e-5)
    assert jnp.allclose(out_none, _reference(x, target, "none"),
                        atol=1e-5, rtol=1e-5)

    # bf16 ingestion + explicit small tile -> multi-step grid with a partial
    # last block.
    x_bf16 = x.astype(jnp.bfloat16)
    out_bf16 = label_smoothing_cross_entropy(x_bf16, target, reduction="none",
                                             block_rows=16)
    jax.block_until_ready(out_bf16)
    assert jnp.allclose(out_bf16, _reference(x_bf16, target, "none"),
                        atol=1e-4, rtol=1e-4)

    print("KERNEL_OK")
</pallas_src>

<mosaic_0001>
module attributes {stable_mosaic.version = 11 : i64} {
  func.func @_ls_ce_kernel(%arg0: i32, %arg1: memref<24x32xf32, #tpu.memory_space<vmem>>, %arg2: memref<24x1xi32, #tpu.memory_space<vmem>>, %arg3: memref<1x24xf32, #tpu.memory_space<vmem>>) attributes {dimension_semantics = [#tpu.dimension_semantics<parallel>], iteration_bounds = array<i64: 1>, scalar_prefetch = 0 : i64, scratch_operands = 0 : i64, tpu.core_type = #tpu.core_type<tc>, window_params = [{transform_indices = @transform_0, window_bounds = array<i64: 24, 32>}, {transform_indices = @transform_1, window_bounds = array<i64: 24, 1>}, {transform_indices = @transform_2, window_bounds = array<i64: 1, 24>}]} {
    %c0 = arith.constant 0 : index
    %c0_0 = arith.constant 0 : index
    %0 = vector.load %arg1[%c0, %c0_0] : memref<24x32xf32, #tpu.memory_space<vmem>>, vector<24x32xf32>
    %c0_1 = arith.constant 0 : index
    %c0_2 = arith.constant 0 : index
    %1 = vector.load %arg2[%c0_1, %c0_2] : memref<24x1xi32, #tpu.memory_space<vmem>>, vector<24x1xi32>
    %cst = arith.constant dense<0xFF800000> : vector<24xf32>
    %2 = vector.multi_reduction <maximumf>, %0, %cst [1] : vector<24x32xf32> to vector<24xf32>
    %3 = vector.shape_cast %2 : vector<24xf32> to vector<24x1xf32>
    %4 = vector.broadcast %3 : vector<24x1xf32> to vector<24x32xf32>
    %5 = arith.subf %0, %4 : vector<24x32xf32>
    %6 = math.exp %5 : vector<24x32xf32>
    %cst_3 = arith.constant dense<0.000000e+00> : vector<24xf32>
    %7 = vector.multi_reduction <add>, %6, %cst_3 [1] : vector<24x32xf32> to vector<24xf32>
    %8 = vector.shape_cast %7 : vector<24xf32> to vector<24x1xf32>
    %9 = math.log %8 : vector<24x1xf32>
    %10 = tpu.iota {dimensions = array<i32: 1>} : vector<24x32xi32>
    %11 = vector.broadcast %1 : vector<24x1xi32> to vector<24x32xi32>
    %12 = arith.cmpi eq, %10, %11 : vector<24x32xi32>
    %cst_4 = arith.constant 0.000000e+00 : f32
    %13 = vector.broadcast %cst_4 : f32 to vector<24x32xf32>
    %14 = arith.select %12, %5, %13 : vector<24x32xi1>, vector<24x32xf32>
    %cst_5 = arith.constant dense<0.000000e+00> : vector<24xf32>
    %15 = vector.multi_reduction <add>, %14, %cst_5 [1] : vector<24x32xf32> to vector<24xf32>
    %16 = vector.shape_cast %15 : vector<24xf32> to vector<24x1xf32>
    %cst_6 = arith.constant dense<0.000000e+00> : vector<24xf32>
    %17 = vector.multi_reduction <add>, %5, %cst_6 [1] : vector<24x32xf32> to vector<24xf32>
    %18 = vector.shape_cast %17 : vector<24xf32> to vector<24x1xf32>
    %cst_7 = arith.constant 0.899999976 : f32
    %19 = vector.broadcast %cst_7 : f32 to vector<24x1xf32>
    %20 = arith.mulf %19, %16 : vector<24x1xf32>
    %21 = arith.subf %9, %20 : vector<24x1xf32>
    %cst_8 = arith.constant 3.125000e-03 : f32
    %22 = vector.broadcast %cst_8 : f32 to vector<24x1xf32>
    %23 = arith.mulf %22, %18 : vector<24x1xf32>
    %24 = arith.subf %21, %23 : vector<24x1xf32>
    %c24_i32 = arith.constant 24 : i32
    %25 = arith.muli %arg0, %c24_i32 : i32
    %26 = tpu.iota {dimensions = array<i32: 0>} : vector<24x1xi32>
    %27 = vector.broadcast %25 : i32 to vector<24x1xi32>
    %28 = arith.addi %27, %26 : vector<24x1xi32>
    %c18_i32 = arith.constant 18 : i32
    %29 = vector.broadcast %c18_i32 : i32 to vector<24x1xi32>
    %30 = arith.cmpi slt, %28, %29 : vector<24x1xi32>
    %cst_9 = arith.constant 0.000000e+00 : f32
    %31 = vector.broadcast %cst_9 : f32 to vector<24x1xf32>
    %32 = arith.select %30, %24, %31 : vector<24x1xi1>, vector<24x1xf32>
    %33 = vector.shape_cast %32 : vector<24x1xf32> to vector<1x24xf32>
    %c0_10 = arith.constant 0 : index
    %c0_11 = arith.constant 0 : index
    %34 = vector.load %arg3[%c0_10, %c0_11] : memref<1x24xf32, #tpu.memory_space<vmem>>, vector<1x24xf32>
    tpu.vector_store %arg3[%c0_10, %c0_11], %33 {strides = array<i32>} : memref<1x24xf32, #tpu.memory_space<vmem>>, vector<1x24xf32>,
    return
  }
  func.func @transform_0(%arg0: i32) -> (i32, i32) {
    %c0_i32 = arith.constant 0 : i32
    %c0_i32_0 = arith.constant 0 : i32
    return %arg0, %c0_i32 : i32, i32
  }
  func.func @transform_1(%arg0: i32) -> (i32, i32) {
    %c0_i32 = arith.constant 0 : i32
    %c0_i32_0 = arith.constant 0 : i32
    return %arg0, %c0_i32 : i32, i32
  }
  func.func @transform_2(%arg0: i32) -> (i32, i32) {
    %c0_i32 = arith.constant 0 : i32
    %c0_i32_0 = arith.constant 0 : i32
    return %arg0, %c0_i32 : i32, i32
  }
}

module attributes {stable_mosaic.version = 11 : i64} {
  func.func @_ls_ce_kernel(%arg0: i32, %arg1: memref<24x32xf32, #tpu.memory_space<vmem>>, %arg2: memref<24x1xi32, #tpu.memory_space<vmem>>, %arg3: memref<24x1xf32, #tpu.memory_space<vmem>>) attributes {dimension_semantics = [#tpu.dimension_semantics<parallel>], iteration_bounds = array<i64: 1>, scalar_prefetch = 0 : i64, scratch_operands = 0 : i64, tpu.core_type = #tpu.core_type<tc>, window_params = [{transform_indices = @transform_0, window_bounds = array<i64: 24, 32>}, {transform_indices = @transform_1, window_bounds = array<i64: 24, 1>}, {transform_indices = @transform_2, window_bounds = array<i64: 24, 1>}]} {
    %c0 = arith.constant 0 : index
    %c0_0 = arith.constant 0 : index
    %0 = vector.load %arg1[%c0, %c0_0] : memref<24x32xf32, #tpu.memory_space<vmem>>, vector<24x32xf32>
    %c0_1 = arith.constant 0 : index
    %c0_2 = arith.constant 0 : index
    %1 = vector.load %arg2[%c0_1, %c0_2] : memref<24x1xi32, #tpu.memory_space<vmem>>, vector<24x1xi32>
    %cst = arith.constant dense<0xFF800000> : vector<24xf32>
    %2 = vector.multi_reduction <maximumf>, %0, %cst [1] : vector<24x32xf32> to vector<24xf32>
    %3 = vector.shape_cast %2 : vector<24xf32> to vector<24x1xf32>
    %4 = vector.broadcast %3 : vector<24x1xf32> to vector<24x32xf32>
    %5 = arith.subf %0, %4 : vector<24x32xf32>
    %6 = math.exp %5 : vector<24x32xf32>
    %cst_3 = arith.constant dense<0.000000e+00> : vector<24xf32>
    %7 = vector.multi_reduction <add>, %6, %cst_3 [1] : vector<24x32xf32> to vector<24xf32>
    %8 = vector.shape_cast %7 : vector<24xf32> to vector<24x1xf32>
    %9 = math.log %8 : vector<24x1xf32>
    %10 = tpu.iota {dimensions = array<i32: 1>} : vector<24x32xi32>
    %11 = vector.broadcast %1 : vector<24x1xi32> to vector<24x32xi32>
    %12 = arith.cmpi eq, %10, %11 : vector<24x32xi32>
    %cst_4 = arith.constant 0.000000e+00 : f32
    %13 = vector.broadcast %cst_4 : f32 to vector<24x32xf32>
    %14 = arith.select %12, %5, %13 : vector<24x32xi1>, vector<24x32xf32>
    %cst_5 = arith.constant dense<0.000000e+00> : vector<24xf32>
    %15 = vector.multi_reduction <add>, %14, %cst_5 [1] : vector<24x32xf32> to vector<24xf32>
    %16 = vector.shape_cast %15 : vector<24xf32> to vector<24x1xf32>
    %cst_6 = arith.constant dense<0.000000e+00> : vector<24xf32>
    %17 = vector.multi_reduction <add>, %5, %cst_6 [1] : vector<24x32xf32> to vector<24xf32>
    %18 = vector.shape_cast %17 : vector<24xf32> to vector<24x1xf32>
    %cst_7 = arith.constant 0.899999976 : f32
    %19 = vector.broadcast %cst_7 : f32 to vector<24x1xf32>
    %20 = arith.mulf %19, %16 : vector<24x1xf32>
    %21 = arith.subf %9, %20 : vector<24x1xf32>
    %cst_8 = arith.constant 3.125000e-03 : f32
    %22 = vector.broadcast %cst_8 : f32 to vector<24x1xf32>
    %23 = arith.mulf %22, %18 : vector<24x1xf32>
    %24 = arith.subf %21, %23 : vector<24x1xf32>
    %c24_i32 = arith.constant 24 : i32
    %25 = arith.muli %arg0, %c24_i32 : i32
    %26 = tpu.iota {dimensions = array<i32: 0>} : vector<24x1xi32>
    %27 = vector.broadcast %25 : i32 to vector<24x1xi32>
    %28 = arith.addi %27, %26 : vector<24x1xi32>
    %c18_i32 = arith.constant 18 : i32
    %29 = vector.broadcast %c18_i32 : i32 to vector<24x1xi32>
    %30 = arith.cmpi slt, %28, %29 : vector<24x1xi32>
    %cst_9 = arith.constant 0.000000e+00 : f32
    %31 = vector.broadcast %cst_9 : f32 to vector<24x1xf32>
    %32 = arith.select %30, %24, %31 : vector<24x1xi1>, vector<24x1xf32>
    %c0_10 = arith.constant 0 : index
    %c0_11 = arith.constant 0 : index
    %33 = vector.load %arg3[%c0_10, %c0_11] : memref<24x1xf32, #tpu.memory_space<vmem>>, vector<24x1xf32>
    tpu.vector_store %arg3[%c0_10, %c0_11], %32 {strides = array<i32>} : memref<24x1xf32, #tpu.memory_space<vmem>>, vector<24x1xf32>,
    return
  }
  func.func @transform_0(%arg0: i32) -> (i32, i32) {
    %c0_i32 = arith.constant 0 : i32
    %c0_i32_0 = arith.constant 0 : i32
    return %arg0, %c0_i32 : i32, i32
  }
  func.func @transform_1(%arg0: i32) -> (i32, i32) {
    %c0_i32 = arith.constant 0 : i32
    %c0_i32_0 = arith.constant 0 : i32
    return %arg0, %c0_i32 : i32, i32
  }
  func.func @transform_2(%arg0: i32) -> (i32, i32) {
    %c0_i32 = arith.constant 0 : i32
    %c0_i32_0 = arith.constant 0 : i32
    return %arg0, %c0_i32 : i32, i32
  }
}

</mosaic_0001>

<llo_original>
// kernel: tpu_custom_call.1
$region0: #{tpu_custom_call.1}
  #allocation0 [shape = 'u32[]', space=smem, size = 0x4, offset = 0x4, fixed_abs, tag = 'smem constant byte address 0x4 - core index']
  #allocation1 [shape = 'u32[144,128]{1,0:T(1,128)}', space=vmem, size = 0x12000, scoped, tag = 'internal scratch']
  %s0 = inlined_call_operand.vmem [shape: f32[18,32], index: 0, kind: input, shape index: {}]
  %s1 = inlined_call_operand.vmem [shape: s32[18,1], index: 1, kind: input, shape index: {}]
  %s2 = inlined_call_operand.hbm [shape: f32[1,24], index: 2, kind: output, shape index: {}]
  %s3 = sld [smem:[#allocation0]]
  $region18: #{tpu_custom_call.1} parent=0
    _
  %s5 = ssub.s32 1, %s3
  %s6 = scalar_select 0, %s5, %s3
  $region1: #{tpu_custom_call.1} parent=0
    #allocation2 [shape = 'u8[512]{0}', space=vmem, size = 0x400, scoped, tag = 'output window, operand 0, single buffered']
    #allocation3 [shape = 's32[1]{0}', space=sflag, size = 0x4, scoped, tag = 'scoped memory for tpu_custom_call.1']
    %7 = vsyncpa [#allocation3], 0
    // Predicated region
    $region2: #{tpu_custom_call.1} parent=1 // pred_check
      _
    $region3: #{tpu_custom_call.1} parent=1 // pred_check_branch
      %9 = sbr.rel (0) target = $region5
    $region4: #{tpu_custom_call.1} parent=1 // pred_region
      _
    $region5: #{tpu_custom_call.1} parent=1 // pred_fallthru
      _
    // Predicated region
    $region6: #{tpu_custom_call.1} parent=1 // pred_check
      _
    $region7: #{tpu_custom_call.1} parent=1 // pred_check_branch
      %11 = sbr.rel (0) target = $region9
    $region8: #{tpu_custom_call.1} parent=1 // pred_region
      _
    $region9: #{tpu_custom_call.1} parent=1 // pred_fallthru
      _
    %v12 = vld [vmem:[%s0] sm:$0xff]
    %v13 = vld [vmem:[%s0 + $0x8] sm:$0xff]
    %v14 = vld [vmem:[%s0 + $0x10] sm:$0xff]
    %v15 = vld [vmem:[%s1] sm:$0xff]
    %v16 = vld [vmem:[%s1 + $0x8] sm:$0xff]
    %v17 = vld [vmem:[%s1 + $0x10] sm:$0xff]
    %vm18 = vcmask 261120
    %v19 = vsel %vm18, %v12, -inf
    %20 = vmax.xlane.f32.xlu0 %v19
    %v21 = vpop.xlane.xlu0 %20
    %v22 = vsel %vm18, %v13, -inf
    %23 = vmax.xlane.f32.xlu0 %v22
    %v24 = vpop.xlane.xlu0 %23
    %v25 = vsel %vm18, %v14, -inf
    %26 = vmax.xlane.f32.xlu0 %v25
    %v27 = vpop.xlane.xlu0 %26
    %v28 = vsub.f32 %v12, %v21
    %v29 = vsub.f32 %v13, %v24
    %v30 = vsub.f32 %v14, %v27
    %v31 = vmul.f32 %v28, 1.442695
    %v32 = vpow.pop %v31
    %v33 = vmul.f32 %v29, 1.442695
    %v34 = vpow.pop %v33
    %v35 = vmul.f32 %v30, 1.442695
    %v36 = vpow.pop %v35
    %v37 = vsel %vm18, %v32, 0.0
    %38 = vadd.xlane.f32.xlu0 %v37
    %v39 = vpop.xlane.xlu0 %38
    %v40 = vsel %vm18, %v34, 0.0
    %41 = vadd.xlane.f32.xlu0 %v40
    %v42 = vpop.xlane.xlu0 %41
    %v43 = vsel %vm18, %v36, 0.0
    %44 = vadd.xlane.f32.xlu0 %v43
    %v45 = vpop.xlane.xlu0 %44
    %v46 = vlog2.pop %v39
    %v47 = vmul.f32 %v46, 0.6931472
    %v48 = vlog2.pop %v42
    %v49 = vmul.f32 %v48, 0.6931472
    %v50 = vlog2.pop %v45
    %v51 = vmul.f32 %v50, 0.6931472
    %v52 = vlaneseq
    %v53 = vand.u32 %v52, 127
    %54 = vset.pattern.permute.xlu0 0
    %55 = vperm.xlu0 %54, %v15
    %v56 = vpop.permute.xlu0 %55
    %57 = vset.pattern.permute.xlu0 0
    %58 = vperm.xlu0 %57, %v16
    %v59 = vpop.permute.xlu0 %58
    %60 = vset.pattern.permute.xlu0 0
    %61 = vperm.xlu0 %60, %v17
    %v62 = vpop.permute.xlu0 %61
    %vm63 = vcmp.eq.s32.totalorder %v53, %v56
    %vm64 = vcmp.eq.s32.totalorder %v53, %v59
    %vm65 = vcmp.eq.s32.totalorder %v53, %v62
    %v66 = vsel %vm63, %v28, 0.0
    %v67 = vsel %vm64, %v29, 0.0
    %v68 = vsel %vm65, %v30, 0.0
    %v69 = vsel %vm18, %v66, 0.0
    %70 = vadd.xlane.f32.xlu0 %v69
    %v71 = vpop.xlane.xlu0 %70
    %v72 = vsel %vm18, %v67, 0.0
    %73 = vadd.xlane.f32.xlu0 %v72
    %v74 = vpop.xlane.xlu0 %73
    %v75 = vsel %vm18, %v68, 0.0
    %76 = vadd.xlane.f32.xlu0 %v75
    %v77 = vpop.xlane.xlu0 %76
    %v78 = vsel %vm18, %v28, 0.0
    %79 = vadd.xlane.f32.xlu0 %v78
    %v80 = vpop.xlane.xlu0 %79
    %v81 = vsel %vm18, %v29, 0.0
    %82 = vadd.xlane.f32.xlu0 %v81
    %v83 = vpop.xlane.xlu0 %82
    %v84 = vsel %vm18, %v30, 0.0
    %85 = vadd.xlane.f32.xlu0 %v84
    %v86 = vpop.xlane.xlu0 %85
    %v87 = vmul.f32 %v71, 0.9
    %v88 = vmul.f32 %v74, 0.9
    %v89 = vmul.f32 %v77, 0.9
    %v90 = vsub.f32 %v47, %v87
    %v91 = vsub.f32 %v49, %v88
    %v92 = vsub.f32 %v51, %v89
    %v93 = vmul.f32 %v80, 0.003125
    %v94 = vmul.f32 %v83, 0.003125
    %v95 = vmul.f32 %v86, 0.003125
    %v96 = vsub.f32 %v90, %v93
    %v97 = vsub.f32 %v91, %v94
    %v98 = vsub.f32 %v92, %v95
    %s99 = smul.u32 0, 24
    %v100 = vlaneseq
    %v101 = vshrl.u32 %v100, 7
    %v102 = vadd.s32 %v101, 8
    %v103 = vadd.s32 %v101, 16
    %v104 = vstv %s99
    %v105 = vadd.s32 %v104, %v101
    %v106 = vadd.s32 %v104, %v102
    %v107 = vadd.s32 %v104, %v103
    %vm108 = vcmp.lt.s32.totalorder %v105, 18
    %vm109 = vcmp.lt.s32.totalorder %v106, 18
    %vm110 = vcmp.lt.s32.totalorder %v107, 18
    %v111 = vsel %vm108, %v96, 0.0
    %v112 = vsel %vm109, %v97, 0.0
    %v113 = vsel %vm110, %v98, 0.0
    %v117 = vlaneseq
    %v118 = vshrl.u32 %v117, 7
    %v119 = vsub.s32 %v53, %v118
    %v120 = vrot.slane %v111, %v119
    %v121 = vadd.s32 %v53, 4294967288
    %v122 = vlaneseq
    %v123 = vshrl.u32 %v122, 7
    %v124 = vsub.s32 %v121, %v123
    %v125 = vrot.slane %v112, %v124
    %vm126 = vcmask 130112
    %v127 = vsel %vm126, %v125, %v120
    %v128 = vadd.s32 %v53, 4294967280
    %v129 = vlaneseq
    %v130 = vshrl.u32 %v129, 7
    %v131 = vsub.s32 %v128, %v130
    %v132 = vrot.slane %v113, %v131
    %vm133 = vcmask 195712
    %v134 = vsel %vm133, %v132, %v127
    %vm136 = vcmask 188416
    %137 = vst.msk [vmem:[#allocation2] sm:$0x1] %vm136, %v134
    // Predicated region
    $region10: #{tpu_custom_call.1} parent=1 // pred_check
      _
    $region11: #{tpu_custom_call.1} parent=1 // pred_check_branch
      %139 = sbr.rel (0) target = $region13
    $region12: #{tpu_custom_call.1} parent=1 // pred_region
      %s141 = ssub.s32 16, 16
      %142 = vsyncadd [#allocation3], %s141
      %s144 = sshll.u32 [#allocation2], 4
      %s145 = int_to_ptr.vmem [resolvable:$true] %s144
      %147 = dma.vmem_to_hbm [thread:$0]  %s145, 16, %s2, [#allocation3]
    $region13: #{tpu_custom_call.1} parent=1 // pred_fallthru
      _
    // Predicated region
    $region14: #{tpu_custom_call.1} parent=1 // pred_check
      _
    $region15: #{tpu_custom_call.1} parent=1 // pred_check_branch
      %149 = sbr.rel (0) target = $region17
    $region16: #{tpu_custom_call.1} parent=1 // pred_region
      %150 = dma.done [#allocation3], 16
    $region17: #{tpu_custom_call.1} parent=1 // pred_fallthru
      _
    %151 = vsyncpa [#allocation3], 1

// kernel: tpu_custom_call.1
$region0: #{tpu_custom_call.1}
  #allocation0 [shape = 'u32[]', space=smem, size = 0x4, offset = 0x4, fixed_abs, tag = 'smem constant byte address 0x4 - core index']
  #allocation1 [shape = 'u32[144,128]{1,0:T(1,128)}', space=vmem, size = 0x12000, scoped, tag = 'internal scratch']
  %s0 = inlined_call_operand.vmem [shape: f32[18,32], index: 0, kind: input, shape index: {}]
  %s1 = inlined_call_operand.vmem [shape: s32[18,1], index: 1, kind: input, shape index: {}]
  %s2 = inlined_call_operand.vmem [shape: f32[24,1], index: 2, kind: output, shape index: {}]
  %s3 = sld [smem:[#allocation0]]
  $region18: #{tpu_custom_call.1} parent=0
    _
  %s5 = ssub.s32 1, %s3
  %s6 = scalar_select 0, %s5, %s3
  // Predicated region
  $region2: #{tpu_custom_call.1} parent=0 // pred_check
    _
  $region3: #{tpu_custom_call.1} parent=0 // pred_check_branch
    %8 = sbr.rel (0) target = $region5
  $region4: #{tpu_custom_call.1} parent=0 // pred_region
    _
  $region5: #{tpu_custom_call.1} parent=0 // pred_fallthru
    _
  // Predicated region
  $region6: #{tpu_custom_call.1} parent=0 // pred_check
    _
  $region7: #{tpu_custom_call.1} parent=0 // pred_check_branch
    %10 = sbr.rel (0) target = $region9
  $region8: #{tpu_custom_call.1} parent=0 // pred_region
    _
  $region9: #{tpu_custom_call.1} parent=0 // pred_fallthru
    _
  %v11 = vld [vmem:[%s0] sm:$0xff]
  %v12 = vld [vmem:[%s0 + $0x8] sm:$0xff]
  %v13 = vld [vmem:[%s0 + $0x10] sm:$0xff]
  %v14 = vld [vmem:[%s1] sm:$0xff]
  %v15 = vld [vmem:[%s1 + $0x8] sm:$0xff]
  %v16 = vld [vmem:[%s1 + $0x10] sm:$0xff]
  %vm17 = vcmask 261120
  %v18 = vsel %vm17, %v11, -inf
  %19 = vmax.xlane.f32.xlu0 %v18
  %v20 = vpop.xlane.xlu0 %19
  %v21 = vsel %vm17, %v12, -inf
  %22 = vmax.xlane.f32.xlu0 %v21
  %v23 = vpop.xlane.xlu0 %22
  %v24 = vsel %vm17, %v13, -inf
  %25 = vmax.xlane.f32.xlu0 %v24
  %v26 = vpop.xlane.xlu0 %25
  %v27 = vsub.f32 %v11, %v20
  %v28 = vsub.f32 %v12, %v23
  %v29 = vsub.f32 %v13, %v26
  %v30 = vmul.f32 %v27, 1.442695
  %v31 = vpow.pop %v30
  %v32 = vmul.f32 %v28, 1.442695
  %v33 = vpow.pop %v32
  %v34 = vmul.f32 %v29, 1.442695
  %v35 = vpow.pop %v34
  %v36 = vsel %vm17, %v31, 0.0
  %37 = vadd.xlane.f32.xlu0 %v36
  %v38 = vpop.xlane.xlu0 %37
  %v39 = vsel %vm17, %v33, 0.0
  %40 = vadd.xlane.f32.xlu0 %v39
  %v41 = vpop.xlane.xlu0 %40
  %v42 = vsel %vm17, %v35, 0.0
  %43 = vadd.xlane.f32.xlu0 %v42
  %v44 = vpop.xlane.xlu0 %43
  %v45 = vlog2.pop %v38
  %v46 = vmul.f32 %v45, 0.6931472
  %v47 = vlog2.pop %v41
  %v48 = vmul.f32 %v47, 0.6931472
  %v49 = vlog2.pop %v44
  %v50 = vmul.f32 %v49, 0.6931472
  %v51 = vlaneseq
  %v52 = vand.u32 %v51, 127
  %53 = vset.pattern.permute.xlu0 0
  %54 = vperm.xlu0 %53, %v14
  %v55 = vpop.permute.xlu0 %54
  %56 = vset.pattern.permute.xlu0 0
  %57 = vperm.xlu0 %56, %v15
  %v58 = vpop.permute.xlu0 %57
  %59 = vset.pattern.permute.xlu0 0
  %60 = vperm.xlu0 %59, %v16
  %v61 = vpop.permute.xlu0 %60
  %vm62 = vcmp.eq.s32.totalorder %v52, %v55
  %vm63 = vcmp.eq.s32.totalorder %v52, %v58
  %vm64 = vcmp.eq.s32.totalorder %v52, %v61
  %v65 = vsel %vm62, %v27, 0.0
  %v66 = vsel %vm63, %v28, 0.0
  %v67 = vsel %vm64, %v29, 0.0
  %v68 = vsel %vm17, %v65, 0.0
  %69 = vadd.xlane.f32.xlu0 %v68
  %v70 = vpop.xlane.xlu0 %69
  %v71 = vsel %vm17, %v66, 0.0
  %72 = vadd.xlane.f32.xlu0 %v71
  %v73 = vpop.xlane.xlu0 %72
  %v74 = vsel %vm17, %v67, 0.0
  %75 = vadd.xlane.f32.xlu0 %v74
  %v76 = vpop.xlane.xlu0 %75
  %v77 = vsel %vm17, %v27, 0.0
  %78 = vadd.xlane.f32.xlu0 %v77
  %v79 = vpop.xlane.xlu0 %78
  %v80 = vsel %vm17, %v28, 0.0
  %81 = vadd.xlane.f32.xlu0 %v80
  %v82 = vpop.xlane.xlu0 %81
  %v83 = vsel %vm17, %v29, 0.0
  %84 = vadd.xlane.f32.xlu0 %v83
  %v85 = vpop.xlane.xlu0 %84
  %v86 = vmul.f32 %v70, 0.9
  %v87 = vmul.f32 %v73, 0.9
  %v88 = vmul.f32 %v76, 0.9
  %v89 = vsub.f32 %v46, %v86
  %v90 = vsub.f32 %v48, %v87
  %v91 = vsub.f32 %v50, %v88
  %v92 = vmul.f32 %v79, 0.003125
  %v93 = vmul.f32 %v82, 0.003125
  %v94 = vmul.f32 %v85, 0.003125
  %v95 = vsub.f32 %v89, %v92
  %v96 = vsub.f32 %v90, %v93
  %v97 = vsub.f32 %v91, %v94
  %s98 = smul.u32 0, 24
  %v99 = vlaneseq
  %v100 = vshrl.u32 %v99, 7
  %v101 = vadd.s32 %v100, 8
  %v102 = vadd.s32 %v100, 16
  %v103 = vstv %s98
  %v104 = vadd.s32 %v103, %v100
  %v105 = vadd.s32 %v103, %v101
  %v106 = vadd.s32 %v103, %v102
  %vm107 = vcmp.lt.s32.totalorder %v104, 18
  %vm108 = vcmp.lt.s32.totalorder %v105, 18
  %vm109 = vcmp.lt.s32.totalorder %v106, 18
  %v110 = vsel %vm107, %v95, 0.0
  %v111 = vsel %vm108, %v96, 0.0
  %v112 = vsel %vm109, %v97, 0.0
  %vm113 = vcmask 7168
  %114 = vst.msk [vmem:[%s2] sm:$0xff] %vm113, %v110
  %115 = vst.msk [vmem:[%s2 + $0x8] sm:$0xff] %vm113, %v111
  %116 = vst.msk [vmem:[%s2 + $0x10] sm:$0xff] %vm113, %v112
  // Predicated region
  $region10: #{tpu_custom_call.1} parent=0 // pred_check
    _
  $region11: #{tpu_custom_call.1} parent=0 // pred_check_branch
    %118 = sbr.rel (0) target = $region13
  $region12: #{tpu_custom_call.1} parent=0 // pred_region
    _
  $region13: #{tpu_custom_call.1} parent=0 // pred_fallthru
    _
  // Predicated region
  $region14: #{tpu_custom_call.1} parent=0 // pred_check
    _
  $region15: #{tpu_custom_call.1} parent=0 // pred_check_branch
    %120 = sbr.rel (0) target = $region17
  $region16: #{tpu_custom_call.1} parent=0 // pred_region
    _
  $region17: #{tpu_custom_call.1} parent=0 // pred_fallthru
    _

</llo_original>
